<compile_context>
chip_gen: v5e
topology: v5e:2x2
jax: 0.10.0
libtpu: 0.0.40
codegen_flags: <defaults>
</compile_context>

<pallas_src>
import jax
import jax.numpy as jnp
from jax.experimental import pallas as pl
from jax.experimental.pallas import tpu as pltpu

_LANES = 128


def _make_l1_mean_kernel(inv_n):
    """Builds the kernel with the (static) 1/num_elements baked in."""

    def kernel(a_ref, b_ref, o_ref, acc_ref):
        # a_ref, b_ref: (tile_rows, 128) blocks of the flattened inputs.
        # acc_ref: (1, 1) f32 VMEM scratch accumulator. o_ref: (1, 1) f32.
        step = pl.program_id(0)

        @pl.when(step == 0)
        def _():
            acc_ref[...] = jnp.zeros_like(acc_ref)

        diff = jnp.abs(
            a_ref[...].astype(jnp.float32) - b_ref[...].astype(jnp.float32)
        )
        acc_ref[...] += jnp.sum(diff, keepdims=True)  # (1, 1) partial sum

        @pl.when(step == pl.num_programs(0) - 1)
        def _():
            o_ref[...] = acc_ref[...] * inv_n

    return kernel


def cycle_consistency_loss(ori, cyc, *, tile_rows=2048):
    """Pallas equivalent of Cycle_Consistency.forward: mean(|ori - cyc|)."""
    assert ori.shape == cyc.shape, "ori and cyc must have the same shape"
    n = ori.size

    # Contiguous flatten (no transpose -> no extra HBM traffic).
    a = ori.reshape(-1).astype(jnp.float32)
    b = cyc.reshape(-1).astype(jnp.float32)

    # Lane-dense layout: (rows, 128). Clamp the tile to the data size for tiny
    # inputs; powers of two >= 8 keep the sublane dim a multiple of 8.
    rows = pl.cdiv(n, _LANES)
    tile_rows = min(tile_rows, max(8, pl.next_power_of_2(rows)))
    padded_rows = pl.cdiv(rows, tile_rows) * tile_rows

    pad = padded_rows * _LANES - n
    if pad:
        # Zero-pad both inputs identically: |0 - 0| contributes nothing.
        a = jnp.pad(a, (0, pad))
        b = jnp.pad(b, (0, pad))

    a2 = a.reshape(padded_rows, _LANES)
    b2 = b.reshape(padded_rows, _LANES)

    kernel = _make_l1_mean_kernel(1.0 / float(n))

    out = pl.pallas_call(
        kernel,
        out_shape=jax.ShapeDtypeStruct((1, 1), jnp.float32),
        grid_spec=pltpu.PrefetchScalarGridSpec(
            num_scalar_prefetch=0,
            grid=(padded_rows // tile_rows,),
            in_specs=[
                pl.BlockSpec((tile_rows, _LANES), lambda i: (i, 0)),
                pl.BlockSpec((tile_rows, _LANES), lambda i: (i, 0)),
            ],
            out_specs=pl.BlockSpec((1, 1), lambda i: (0, 0)),
            scratch_shapes=[pltpu.VMEM((1, 1), jnp.float32)],
        ),
        compiler_params=pltpu.CompilerParams(
            # Reduction axis with a carried accumulator -> "arbitrary".
            dimension_semantics=("arbitrary",),
        ),
    )(a2, b2)

    return out[0, 0]


if __name__ == "__main__":
    key = jax.random.PRNGKey(0)
    k_ori, k_cyc = jax.random.split(key)

    N, C, H, W = 2, 4, 16, 16
    ori = jax.random.normal(k_ori, (N, C, H, W), jnp.float32)
    cyc = jax.random.normal(k_cyc, (N, C, H, W), jnp.float32)

    loss = cycle_consistency_loss(ori, cyc)
    jax.block_until_ready(loss)

    # Reference: plain-JAX mean absolute error (matches torch.mean(torch.abs(..))).
    ref = jnp.mean(jnp.abs(ori - cyc))
    assert loss.shape == ()
    assert jnp.allclose(loss, ref, atol=1e-6, rtol=1e-6), (loss, ref)

    print("KERNEL_OK")
</pallas_src>

<mosaic_0001>
module attributes {stable_mosaic.version = 11 : i64} {
  func.func @kernel(%arg0: i32, %arg1: memref<16x128xf32, #tpu.memory_space<vmem>>, %arg2: memref<16x128xf32, #tpu.memory_space<vmem>>, %arg3: memref<1x1xf32, #tpu.memory_space<vmem>>, %arg4: memref<1x1xf32, #tpu.memory_space<vmem>>) attributes {dimension_semantics = [#tpu.dimension_semantics<arbitrary>], iteration_bounds = array<i64: 1>, scalar_prefetch = 0 : i64, scratch_operands = 1 : i64, tpu.core_type = #tpu.core_type<tc>, window_params = [{transform_indices = @transform_0, window_bounds = array<i64: 16, 128>}, {transform_indices = @transform_1, window_bounds = array<i64: 16, 128>}, {pipeline_mode = #tpu.pipeline_mode<synchronous>, transform_indices = @transform_2, window_bounds = array<i64: 1, 1>}]} {
    %c0_i32 = arith.constant 0 : i32
    %0 = arith.cmpi eq, %arg0, %c0_i32 : i32
    %1 = arith.extui %0 : i1 to i32
    %c0_i32_0 = arith.constant 0 : i32
    %2 = arith.cmpi ne, %1, %c0_i32_0 : i32
    scf.if %2 {
      %cst_10 = arith.constant 0.000000e+00 : f32
      %18 = vector.broadcast %cst_10 : f32 to vector<1x1xf32>
      %c0_11 = arith.constant 0 : index
      %c0_12 = arith.constant 0 : index
      %19 = vector.load %arg4[%c0_11, %c0_12] : memref<1x1xf32, #tpu.memory_space<vmem>>, vector<1x1xf32>
      tpu.vector_store %arg4[%c0_11, %c0_12], %18 {strides = array<i32>} : memref<1x1xf32, #tpu.memory_space<vmem>>, vector<1x1xf32>,
    } else {
    }
    %c0 = arith.constant 0 : index
    %c0_1 = arith.constant 0 : index
    %3 = vector.load %arg1[%c0, %c0_1] : memref<16x128xf32, #tpu.memory_space<vmem>>, vector<16x128xf32>
    %c0_2 = arith.constant 0 : index
    %c0_3 = arith.constant 0 : index
    %4 = vector.load %arg2[%c0_2, %c0_3] : memref<16x128xf32, #tpu.memory_space<vmem>>, vector<16x128xf32>
    %5 = arith.subf %3, %4 : vector<16x128xf32>
    %6 = math.absf %5 : vector<16x128xf32>
    %c0_4 = arith.constant 0 : index
    %c0_5 = arith.constant 0 : index
    %7 = vector.load %arg4[%c0_4, %c0_5] : memref<1x1xf32, #tpu.memory_space<vmem>>, vector<1x1xf32>
    %8 = vector.shape_cast %6 : vector<16x128xf32> to vector<1x16x128xf32>
    %cst = arith.constant dense<0.000000e+00> : vector<1xf32>
    %9 = vector.multi_reduction <add>, %8, %cst [1, 2] : vector<1x16x128xf32> to vector<1xf32>
    %10 = vector.shape_cast %9 : vector<1xf32> to vector<1x1x1xf32>
    %11 = vector.extract %10[0, 0, 0] : f32 from vector<1x1x1xf32>
    %12 = vector.broadcast %11 : f32 to vector<1x1xf32>
    %13 = arith.addf %7, %12 : vector<1x1xf32>
    %c0_6 = arith.constant 0 : index
    %c0_7 = arith.constant 0 : index
    %14 = vector.load %arg4[%c0_6, %c0_7] : memref<1x1xf32, #tpu.memory_space<vmem>>, vector<1x1xf32>
    tpu.vector_store %arg4[%c0_6, %c0_7], %13 {strides = array<i32>} : memref<1x1xf32, #tpu.memory_space<vmem>>, vector<1x1xf32>,
    %c0_i32_8 = arith.constant 0 : i32
    %15 = arith.cmpi eq, %arg0, %c0_i32_8 : i32
    %16 = arith.extui %15 : i1 to i32
    %c0_i32_9 = arith.constant 0 : i32
    %17 = arith.cmpi ne, %16, %c0_i32_9 : i32
    scf.if %17 {
      %c0_10 = arith.constant 0 : index
      %c0_11 = arith.constant 0 : index
      %18 = vector.load %arg4[%c0_10, %c0_11] : memref<1x1xf32, #tpu.memory_space<vmem>>, vector<1x1xf32>
      %cst_12 = arith.constant 4.8828125E-4 : f32
      %19 = vector.broadcast %cst_12 : f32 to vector<1x1xf32>
      %20 = arith.mulf %18, %19 : vector<1x1xf32>
      %c0_13 = arith.constant 0 : index
      %c0_14 = arith.constant 0 : index
      %21 = vector.load %arg3[%c0_13, %c0_14] : memref<1x1xf32, #tpu.memory_space<vmem>>, vector<1x1xf32>
      tpu.vector_store %arg3[%c0_13, %c0_14], %20 {strides = array<i32>} : memref<1x1xf32, #tpu.memory_space<vmem>>, vector<1x1xf32>,
    } else {
    }
    return
  }
  func.func @transform_0(%arg0: i32) -> (i32, i32) {
    %c0_i32 = arith.constant 0 : i32
    %c0_i32_0 = arith.constant 0 : i32
    return %arg0, %c0_i32 : i32, i32
  }
  func.func @transform_1(%arg0: i32) -> (i32, i32) {
    %c0_i32 = arith.constant 0 : i32
    %c0_i32_0 = arith.constant 0 : i32
    return %arg0, %c0_i32 : i32, i32
  }
  func.func @transform_2(%arg0: i32) -> (i32, i32) {
    %c0_i32 = arith.constant 0 : i32
    %c0_i32_0 = arith.constant 0 : i32
    %c0_i32_1 = arith.constant 0 : i32
    return %c0_i32, %c0_i32_0 : i32, i32
  }
}

</mosaic_0001>

<llo_original>
// kernel: tpu_custom_call.1
$region0: #{tpu_custom_call.1}
  #allocation0 [shape = 'u32[]', space=smem, size = 0x4, offset = 0x4, fixed_abs, tag = 'smem constant byte address 0x4 - core index']
  #allocation1 [shape = 'u32[72,128]{1,0:T(1,128)}', space=vmem, size = 0x9000, scoped, tag = 'internal scratch']
  #allocation2 [shape = 'f32[1,1]{1,0:T(1,128)}', space=vmem, size = 0x200, scoped, tag = 'scratch operand']
  %s0 = inlined_call_operand.hbm [shape: f32[16,128], index: 0, kind: input, shape index: {}]
  %s1 = inlined_call_operand.hbm [shape: f32[16,128], index: 1, kind: input, shape index: {}]
  %s2 = inlined_call_operand.hbm [shape: f32[1,1], index: 2, kind: output, shape index: {}]
  %s3 = sld [smem:[#allocation0]]
  $region34: #{tpu_custom_call.1} parent=0
    _
  %s5 = ssub.s32 1, %s3
  %s6 = scalar_select 0, %s5, %s3
  $region1: #{tpu_custom_call.1} parent=0
    #allocation3 [shape = 'u8[8192]{0}', space=vmem, size = 0x2000, scoped, tag = 'input window, operand 0, single buffered']
    #allocation4 [shape = 's32[1]{0}', space=sflag, size = 0x4, scoped, tag = 'scoped memory for tpu_custom_call.1']
    #allocation5 [shape = 's32[1]{0}', space=sflag, size = 0x4, scoped, tag = 'scoped memory for tpu_custom_call.1']
    #allocation6 [shape = 'u8[8192]{0}', space=vmem, size = 0x2000, scoped, tag = 'input window, operand 1, single buffered']
    #allocation7 [shape = 's32[1]{0}', space=sflag, size = 0x4, scoped, tag = 'scoped memory for tpu_custom_call.1']
    #allocation8 [shape = 'u8[512]{0}', space=vmem, size = 0x400, scoped, tag = 'output window, operand 0, single buffered']
    %7 = vsyncpa [#allocation4], 0
    %8 = vsyncpa [#allocation7], 0
    %9 = vsyncpa [#allocation5], 0
    // Predicated region
    $region2: #{tpu_custom_call.1} parent=1 // pred_check
      _
    $region3: #{tpu_custom_call.1} parent=1 // pred_check_branch
      %11 = sbr.rel (0) target = $region5
    $region4: #{tpu_custom_call.1} parent=1 // pred_region
      %13 = vsyncadd [#allocation4], 0
      %s14 = sshll.u32 %s0, 4
      %s15 = int_to_ptr.hbm [resolvable:$true] %s14
      %s16 = sshll.u32 [#allocation3], 4
      %s17 = int_to_ptr.vmem [resolvable:$true] %s16
      %22 = dma.hbm_to_vmem [thread:$0]  %s15, 256, %s17, [#allocation4], 128, 128, 8
    $region5: #{tpu_custom_call.1} parent=1 // pred_fallthru
      _
    // Predicated region
    $region6: #{tpu_custom_call.1} parent=1 // pred_check
      _
    $region7: #{tpu_custom_call.1} parent=1 // pred_check_branch
      %24 = sbr.rel (0) target = $region9
    $region8: #{tpu_custom_call.1} parent=1 // pred_region
      %26 = vsyncadd [#allocation7], 0
      %s27 = sshll.u32 %s1, 4
      %s28 = int_to_ptr.hbm [resolvable:$true] %s27
      %s29 = sshll.u32 [#allocation6], 4
      %s30 = int_to_ptr.vmem [resolvable:$true] %s29
      %35 = dma.hbm_to_vmem [thread:$0]  %s28, 256, %s30, [#allocation7], 128, 128, 8
    $region9: #{tpu_custom_call.1} parent=1 // pred_fallthru
      _
    // Predicated region
    $region10: #{tpu_custom_call.1} parent=1 // pred_check
      _
    $region11: #{tpu_custom_call.1} parent=1 // pred_check_branch
      %37 = sbr.rel (0) target = $region13
    $region12: #{tpu_custom_call.1} parent=1 // pred_region
      %39 = dma.done [#allocation4], 256
    $region13: #{tpu_custom_call.1} parent=1 // pred_fallthru
      _
    // Predicated region
    $region14: #{tpu_custom_call.1} parent=1 // pred_check
      _
    $region15: #{tpu_custom_call.1} parent=1 // pred_check_branch
      %41 = sbr.rel (0) target = $region17
    $region16: #{tpu_custom_call.1} parent=1 // pred_region
      %43 = dma.done [#allocation7], 256
    $region17: #{tpu_custom_call.1} parent=1 // pred_fallthru
      _
    %p44 = scmp.eq.s32.totalorder 0, 0
    // Predicated region
    $region18: #{tpu_custom_call.1} parent=1 // pred_check
      %p45 = pneg %p44
    $region19: #{tpu_custom_call.1} parent=1 // pred_check_branch
      %47 = sbr.rel (%p45) target = $region21
    $region20: #{tpu_custom_call.1} parent=1 // pred_region
      %vm48 = vcmask 0
      %49 = vst.msk [vmem:[#allocation2] sm:$0x1] %vm48, 0.0
    $region21: #{tpu_custom_call.1} parent=1 // pred_fallthru
      _
    %v50 = vld [vmem:[#allocation3] sm:$0xff]
    %v51 = vld [vmem:[#allocation3 + $0x8] sm:$0xff]
    %v52 = vld [vmem:[#allocation6] sm:$0xff]
    %v53 = vld [vmem:[#allocation6 + $0x8] sm:$0xff]
    %v54 = vsub.f32 %v50, %v52
    %v55 = vsub.f32 %v51, %v53
    %v56 = vand.u32 2147483647, %v54
    %v57 = vand.u32 2147483647, %v55
    %v58 = vld [vmem:[#allocation2] sm:$0x1]
    %v59 = vadd.f32 %v56, %v57
    %60 = vadd.xlane.f32.xlu0 %v59
    %v61 = vpop.xlane.xlu0 %60
    %v62 = vrot.slane %v61, 4
    %v63 = vadd.f32 %v61, %v62
    %v64 = vrot.slane %v63, 2
    %v65 = vadd.f32 %v63, %v64
    %v66 = vrot.slane %v65, 1
    %v67 = vadd.f32 %v65, %v66
    %s68 = vtos %v67
    %v69 = vstv %s68
    %v70 = vadd.f32 %v58, %v69
    %vm71 = vcmask 0
    %72 = vst.msk [vmem:[#allocation2] sm:$0x1] %vm71, %v70
    // Predicated region
    $region22: #{tpu_custom_call.1} parent=1 // pred_check
      %p73 = pneg %p44
    $region23: #{tpu_custom_call.1} parent=1 // pred_check_branch
      %75 = sbr.rel (%p73) target = $region25
    $region24: #{tpu_custom_call.1} parent=1 // pred_region
      %v76 = vld [vmem:[#allocation2] sm:$0x1]
      %v77 = vmul.f32 %v76, 0.00048828125
      %78 = vst.msk [vmem:[#allocation8] sm:$0x1] %vm71, %v77
    $region25: #{tpu_custom_call.1} parent=1 // pred_fallthru
      _
    // Predicated region
    $region26: #{tpu_custom_call.1} parent=1 // pred_check
      _
    $region27: #{tpu_custom_call.1} parent=1 // pred_check_branch
      %80 = sbr.rel (0) target = $region29
    $region28: #{tpu_custom_call.1} parent=1 // pred_region
      %82 = vsyncadd [#allocation5], 0
      %s84 = sshll.u32 [#allocation8], 4
      %s85 = int_to_ptr.vmem [resolvable:$true] %s84
      %s86 = sshll.u32 %s2, 4
      %s87 = int_to_ptr.hbm [resolvable:$true] %s86
      %89 = dma.vmem_to_hbm [thread:$0]  %s85, 16, %s87, [#allocation5]
    $region29: #{tpu_custom_call.1} parent=1 // pred_fallthru
      _
    // Predicated region
    $region30: #{tpu_custom_call.1} parent=1 // pred_check
      _
    $region31: #{tpu_custom_call.1} parent=1 // pred_check_branch
      %91 = sbr.rel (0) target = $region33
    $region32: #{tpu_custom_call.1} parent=1 // pred_region
      %93 = dma.done [#allocation5], 16
    $region33: #{tpu_custom_call.1} parent=1 // pred_fallthru
      _
    %94 = vsyncpa [#allocation4], 1
    %95 = vsyncpa [#allocation7], 1
    %96 = vsyncpa [#allocation5], 1

</llo_original>
